<compile_context>
chip_gen: v6e
topology: v6e:2x2x1
jax: 0.10.0
libtpu: 0.0.40
codegen_flags: <defaults>
</compile_context>

<pallas_src>
import functools

import jax
import jax.numpy as jnp
from jax import lax
from jax.experimental import pallas as pl
from jax.experimental.pallas import tpu as pltpu

FILTERS = (3, 3, 3, 3)                 # EntropyBottleneck default
FDIMS = (1,) + FILTERS + (1,)          # (1,3,3,3,3,1)
NLAYERS = len(FDIMS) - 1               # 5
INIT_SCALE = 10.0
LIKELIHOOD_BOUND = 1e-9

# packed parameter layout (columns): [median | matrices | biases | factors]
_N_MAT_COLS = sum(FDIMS[i + 1] * FDIMS[i] for i in range(NLAYERS))       # 33
_N_BIAS_COLS = sum(FDIMS[i + 1] for i in range(NLAYERS))                 # 13
_N_FACT_COLS = sum(FDIMS[i + 1] for i in range(NLAYERS - 1))             # 12
_N_COLS = 1 + _N_MAT_COLS + _N_BIAS_COLS + _N_FACT_COLS                  # 59
_PPAD = 128                            # lane-pad the packed param array
assert _N_COLS <= _PPAD


def _cdiv(a, b):
    return -(-a // b)


def _round_up(a, b):
    return _cdiv(a, b) * b


# ---------------------------------------------------------------------------
# Kernel
# ---------------------------------------------------------------------------
def _make_kernel(tile, lane_sub, compute_dtype):
    n_sub = tile // lane_sub

    def kernel(params_ref, x_ref, out_ref, lik_ref):
        # params_ref: (CG, 128) f32 ;  x/out/lik refs: (CG, tile) f32
        P = params_ref[...]
        med = P[:, 0:1]                              # per-channel medians, f32
        Pc = P.astype(compute_dtype)

        # Hoist all per-channel parameter column slices ONCE per grid step;
        # shared by every lane sub-chunk and by both +-0.5 branches.  The
        # (CG,1)-vs-(CG,lane_sub) broadcasts are lane-splats left to Mosaic.
        off = 1
        mats = []                                    # mats[i][j][k]: (CG,1)
        for i in range(NLAYERS):
            f_in, f_out = FDIMS[i], FDIMS[i + 1]
            mats.append([[Pc[:, off + j * f_in + k: off + j * f_in + k + 1]
                          for k in range(f_in)] for j in range(f_out)])
            off += f_out * f_in
        biases = []                                  # biases[i][j]: (CG,1)
        for i in range(NLAYERS):
            f_out = FDIMS[i + 1]
            biases.append([Pc[:, off + j: off + j + 1] for j in range(f_out)])
            off += f_out
        factors = []                                 # factors[i][j]: (CG,1)
        for i in range(NLAYERS - 1):
            f_out = FDIMS[i + 1]
            factors.append([Pc[:, off + j: off + j + 1] for j in range(f_out)])
            off += f_out

        def lane_chunk(s):
            if isinstance(s, int):                   # static unrolled path
                l0 = s * lane_sub
            else:                                    # rolled fori_loop path
                l0 = pl.multiple_of(s * lane_sub, 128)
            x = x_ref[:, pl.ds(l0, lane_sub)]        # (CG, lane_sub) f32

            # quantize ("dequantize" / eval mode)
            q = jnp.round(x - med) + med
            out_ref[:, pl.ds(l0, lane_sub)] = q

            vlo = (q - jnp.float32(0.5)).astype(compute_dtype)

            # layer 0 (f_in == 1): the two branch inputs differ by exactly 1,
            # so the upper pre-activation is the lower one plus the column.
            lower, upper = [], []
            for j in range(FDIMS[1]):
                m = mats[0][j][0]
                a = factors[0][j]
                pre_lo = biases[0][j] + m * vlo
                pre_up = pre_lo + m
                lower.append(pre_lo + a * jnp.tanh(pre_lo))
                upper.append(pre_up + a * jnp.tanh(pre_up))

            # layers 1 .. NLAYERS-1
            for i in range(1, NLAYERS):
                f_in, f_out = FDIMS[i], FDIMS[i + 1]
                new_lo, new_up = [], []
                for j in range(f_out):
                    acc_lo = biases[i][j]
                    acc_up = biases[i][j]
                    for k in range(f_in):
                        m = mats[i][j][k]
                        acc_lo = acc_lo + m * lower[k]
                        acc_up = acc_up + m * upper[k]
                    if i < NLAYERS - 1:
                        a = factors[i][j]
                        acc_lo = acc_lo + a * jnp.tanh(acc_lo)
                        acc_up = acc_up + a * jnp.tanh(acc_up)
                    new_lo.append(acc_lo)
                    new_up.append(acc_up)
                lower, upper = new_lo, new_up

            lo = lower[0].astype(jnp.float32)
            up = upper[0].astype(jnp.float32)
            # sign-flipped sigmoid difference, exactly as the PyTorch
            # reference (preserves relative precision of tail likelihoods).
            t = lo + up
            sgn = jnp.where(t > 0, jnp.float32(-1.0),
                            jnp.where(t < 0, jnp.float32(1.0),
                                      jnp.float32(0.0)))
            lik = jnp.abs(jax.nn.sigmoid(sgn * up) - jax.nn.sigmoid(sgn * lo))
            lik_ref[:, pl.ds(l0, lane_sub)] = jnp.maximum(lik, LIKELIHOOD_BOUND)

        if n_sub <= 4:
            for s in range(n_sub):                   # short static unroll
                lane_chunk(s)
        else:
            def body(s, carry):
                lane_chunk(s)
                return carry
            lax.fori_loop(0, n_sub, body, 0)

    return kernel


# ---------------------------------------------------------------------------
# Parameter init / packing
# ---------------------------------------------------------------------------
def init_entropy_bottleneck_params(channels, key):
    """Deterministic parameter init matching EntropyBottleneck.__init__."""
    scale = INIT_SCALE ** (1.0 / (len(FILTERS) + 1))
    matrices, biases, factors = [], [], []
    keys = jax.random.split(key, NLAYERS)
    for i in range(NLAYERS):
        f_in, f_out = FDIMS[i], FDIMS[i + 1]
        init = float(jnp.log(jnp.expm1(1.0 / (scale * f_out))))
        matrices.append(jnp.full((channels, f_out, f_in), init, jnp.float32))
        biases.append(jax.random.uniform(keys[i], (channels, f_out, 1),
                                         jnp.float32, -0.5, 0.5))
        if i < len(FILTERS):
            factors.append(jnp.zeros((channels, f_out, 1), jnp.float32))
    quantiles = jnp.tile(jnp.array([[-INIT_SCALE, 0.0, INIT_SCALE]],
                                   jnp.float32),
                         (channels, 1)).reshape(channels, 1, 3)
    return dict(matrices=matrices, biases=biases, factors=factors,
                quantiles=quantiles)


def _pack_params(params, C):
    """Pack all per-channel parameters into one (C, _PPAD) f32 array."""
    cols = [params["quantiles"][:, :, 1]]                        # median (C,1)
    for i in range(NLAYERS):
        cols.append(jax.nn.softplus(params["matrices"][i]).reshape(C, -1))
    for i in range(NLAYERS):
        cols.append(params["biases"][i].reshape(C, -1))
    for i in range(NLAYERS - 1):
        cols.append(jnp.tanh(params["factors"][i]).reshape(C, -1))
    packed = jnp.concatenate(cols, axis=1)                        # (C, 59)
    return jnp.pad(packed, ((0, 0), (0, _PPAD - packed.shape[1])))


# ---------------------------------------------------------------------------
# Tiling heuristics
# ---------------------------------------------------------------------------
def _pick_cgroup(C):
    """Channel-group size: small (8-16, multiple of 8, dividing C) so the
    per-group MLP intermediates stay register-resident in the lane loop."""
    if C <= 16:
        return C
    for cg in (16, 8):
        if C % cg == 0:
            return cg
    return C            # odd channel counts: one full-C block (still legal)


def _pick_tile(N, n_cg, CG, L, max_tile):
    """Lane-tile size (multiple of 128) and lane sub-chunk size.

    Honest VMEM accounting: the auto-pipeline double-buffers the 3 data
    operands (x, y_hat, likelihood) -> 6 f32 slabs of (CG, tile); keep them
    under ~12 MiB so the 32 MiB scoped-VMEM limit holds on every generation
    (v7x only has 64 MiB physical VMEM).  Also shrink the tile until the
    all-parallel grid has >= 8 steps so v7x's two TensorCores both get work.
    """
    cap_vmem = (12 * 1024 * 1024) // (6 * 4 * CG)
    tile = min(max_tile, _round_up(L, 128), cap_vmem)
    tile = max(128, (tile // 128) * 128)
    while tile > 128 and N * n_cg * _cdiv(L, tile) < 8:
        tile = max(128, (tile // 2) // 128 * 128)
    lane_sub = 256 if tile % 256 == 0 else 128
    return tile, lane_sub


# ---------------------------------------------------------------------------
# Forward
# ---------------------------------------------------------------------------
@functools.partial(jax.jit, static_argnames=("max_tile", "compute_dtype"))
def compression_model_forward(x_nchw, params, max_tile=4096,
                              compute_dtype=jnp.float32):
    """EntropyBottleneck forward (eval mode). Returns (y_hat, likelihoods).

    compute_dtype=jnp.bfloat16 is an opt-in fast path for v6e/v7x (bf16
    VPU/EUP, ~2x on the VALU/EUP-bound MLP); it does not meet the 1e-4
    self-test tolerance, so f32 is the default (and the only choice on v5e).
    """
    N, C, H, W = x_nchw.shape
    L = H * W

    packed = _pack_params(params, C)                              # (C, 128) f32
    # NCHW kept as-is: (N, C, H*W) is a free contiguous reshape; no transposes,
    # no host-side padding, no post-kernel slicing (ragged last lane block is
    # handled by Pallas padded loads / masked writebacks).
    x3 = x_nchw.reshape(N, C, L).astype(jnp.float32)

    CG = _pick_cgroup(C)
    n_cg = _cdiv(C, CG)
    tile, lane_sub = _pick_tile(N, n_cg, CG, L, max_tile)
    grid = (N, n_cg, pl.cdiv(L, tile))

    kernel = _make_kernel(tile, lane_sub, compute_dtype)

    param_spec = pl.BlockSpec((CG, _PPAD), lambda n, c, i: (c, 0))
    data_spec = pl.BlockSpec((None, CG, tile), lambda n, c, i: (n, c, i))

    out_cl, lik_cl = pl.pallas_call(
        kernel,
        out_shape=(jax.ShapeDtypeStruct((N, C, L), jnp.float32),
                   jax.ShapeDtypeStruct((N, C, L), jnp.float32)),
        grid_spec=pltpu.PrefetchScalarGridSpec(
            num_scalar_prefetch=0,
            grid=grid,
            in_specs=[param_spec, data_spec],
            out_specs=[data_spec, data_spec],
        ),
        compiler_params=pltpu.CompilerParams(
            dimension_semantics=("parallel", "parallel", "parallel"),
            vmem_limit_bytes=32 * 1024 * 1024),
    )(packed, x3)

    return out_cl.reshape(N, C, H, W), lik_cl.reshape(N, C, H, W)


# ---------------------------------------------------------------------------
# Pure-JAX reference (mirrors the PyTorch EntropyBottleneck math)
# ---------------------------------------------------------------------------
def _reference_forward(x, params):
    N, C, H, W = x.shape
    med = params["quantiles"][:, :, 1].reshape(1, C, 1, 1)
    q = jnp.round(x - med) + med

    def logits_cum(v):
        z = v[:, :, None, :, :]                                   # (N,C,1,H,W)
        for i in range(NLAYERS):
            M = jax.nn.softplus(params["matrices"][i])            # (C,fo,fi)
            b = params["biases"][i][..., 0]                       # (C,fo)
            z = jnp.einsum("coi,ncihw->ncohw", M, z) + b[None, :, :, None, None]
            if i < NLAYERS - 1:
                a = jnp.tanh(params["factors"][i][..., 0])        # (C,fo)
                z = z + a[None, :, :, None, None] * jnp.tanh(z)
        return z[:, :, 0, :, :]

    lower = logits_cum(q - 0.5)
    upper = logits_cum(q + 0.5)
    sign = -jnp.sign(lower + upper)
    lik = jnp.abs(jax.nn.sigmoid(sign * upper) - jax.nn.sigmoid(sign * lower))
    return q, jnp.maximum(lik, LIKELIHOOD_BOUND)


if __name__ == "__main__":
    # TODO(synk): CompressionModel.forward() is abstract in the reference code;
    # we implement the EntropyBottleneck forward (its only concrete compute).
    # aux_loss/update/load_state_dict (entropy-coder CDF table bookkeeping)
    # have no kernel-relevant hot path and are not implemented.
    entropy_bottleneck_channels = 8
    key = jax.random.PRNGKey(0)
    k_param, k_x = jax.random.split(key)
    params = init_entropy_bottleneck_params(entropy_bottleneck_channels, k_param)

    # Main check: lane-aligned spatial size.
    N, H, W = 2, 16, 16
    x = 4.0 * jax.random.normal(k_x, (N, entropy_bottleneck_channels, H, W),
                                jnp.float32)
    y_hat, likelihoods = compression_model_forward(x, params)
    jax.block_until_ready((y_hat, likelihoods))

    y_ref, lik_ref = _reference_forward(x, params)
    assert y_hat.shape == x.shape and likelihoods.shape == x.shape
    assert jnp.allclose(y_hat, y_ref, atol=1e-5), "quantized outputs mismatch"
    assert jnp.allclose(likelihoods, lik_ref, atol=1e-4, rtol=1e-4), \
        "likelihoods mismatch"

    # Ragged spatial size (H*W % 128 != 0): exercises the no-host-pad path
    # (Pallas masked writeback on the ragged last lane block).
    xr = 4.0 * jax.random.normal(k_x, (N, entropy_bottleneck_channels, 18, 16),
                                 jnp.float32)
    yr, lr = compression_model_forward(xr, params)
    jax.block_until_ready((yr, lr))
    yr_ref, lr_ref = _reference_forward(xr, params)
    assert jnp.allclose(yr, yr_ref, atol=1e-5), "ragged quantized mismatch"
    assert jnp.allclose(lr, lr_ref, atol=1e-4, rtol=1e-4), \
        "ragged likelihoods mismatch"

    print("KERNEL_OK")
</pallas_src>

<mosaic_0001>
module attributes {stable_mosaic.version = 11 : i64} {
  func.func @kernel(%arg0: i32, %arg1: i32, %arg2: i32, %arg3: memref<8x128xf32, #tpu.memory_space<vmem>>, %arg4: memref<1x8x128xf32, #tpu.memory_space<vmem>>, %arg5: memref<1x8x128xf32, #tpu.memory_space<vmem>>, %arg6: memref<1x8x128xf32, #tpu.memory_space<vmem>>) attributes {dimension_semantics = [#tpu.dimension_semantics<parallel>, #tpu.dimension_semantics<parallel>, #tpu.dimension_semantics<parallel>], iteration_bounds = array<i64: 2, 1, 2>, scalar_prefetch = 0 : i64, scratch_operands = 0 : i64, tpu.core_type = #tpu.core_type<tc>, window_params = [{transform_indices = @transform_0, window_bounds = array<i64: 8, 128>}, {transform_indices = @transform_1, window_bounds = array<i64: 1, 8, 128>}, {transform_indices = @transform_2, window_bounds = array<i64: 1, 8, 128>}, {transform_indices = @transform_3, window_bounds = array<i64: 1, 8, 128>}]} {
    %c0 = arith.constant 0 : index
    %c0_0 = arith.constant 0 : index
    %0 = vector.load %arg3[%c0, %c0_0] : memref<8x128xf32, #tpu.memory_space<vmem>>, vector<8x128xf32>
    %1 = vector.extract_strided_slice %0 {offsets = [0, 0], sizes = [8, 1], strides = [1, 1]} : vector<8x128xf32> to vector<8x1xf32>
    %2 = vector.extract_strided_slice %0 {offsets = [0, 1], sizes = [8, 1], strides = [1, 1]} : vector<8x128xf32> to vector<8x1xf32>
    %3 = vector.extract_strided_slice %0 {offsets = [0, 2], sizes = [8, 1], strides = [1, 1]} : vector<8x128xf32> to vector<8x1xf32>
    %4 = vector.extract_strided_slice %0 {offsets = [0, 3], sizes = [8, 1], strides = [1, 1]} : vector<8x128xf32> to vector<8x1xf32>
    %5 = vector.extract_strided_slice %0 {offsets = [0, 4], sizes = [8, 1], strides = [1, 1]} : vector<8x128xf32> to vector<8x1xf32>
    %6 = vector.extract_strided_slice %0 {offsets = [0, 5], sizes = [8, 1], strides = [1, 1]} : vector<8x128xf32> to vector<8x1xf32>
    %7 = vector.extract_strided_slice %0 {offsets = [0, 6], sizes = [8, 1], strides = [1, 1]} : vector<8x128xf32> to vector<8x1xf32>
    %8 = vector.extract_strided_slice %0 {offsets = [0, 7], sizes = [8, 1], strides = [1, 1]} : vector<8x128xf32> to vector<8x1xf32>
    %9 = vector.extract_strided_slice %0 {offsets = [0, 8], sizes = [8, 1], strides = [1, 1]} : vector<8x128xf32> to vector<8x1xf32>
    %10 = vector.extract_strided_slice %0 {offsets = [0, 9], sizes = [8, 1], strides = [1, 1]} : vector<8x128xf32> to vector<8x1xf32>
    %11 = vector.extract_strided_slice %0 {offsets = [0, 10], sizes = [8, 1], strides = [1, 1]} : vector<8x128xf32> to vector<8x1xf32>
    %12 = vector.extract_strided_slice %0 {offsets = [0, 11], sizes = [8, 1], strides = [1, 1]} : vector<8x128xf32> to vector<8x1xf32>
    %13 = vector.extract_strided_slice %0 {offsets = [0, 12], sizes = [8, 1], strides = [1, 1]} : vector<8x128xf32> to vector<8x1xf32>
    %14 = vector.extract_strided_slice %0 {offsets = [0, 13], sizes = [8, 1], strides = [1, 1]} : vector<8x128xf32> to vector<8x1xf32>
    %15 = vector.extract_strided_slice %0 {offsets = [0, 14], sizes = [8, 1], strides = [1, 1]} : vector<8x128xf32> to vector<8x1xf32>
    %16 = vector.extract_strided_slice %0 {offsets = [0, 15], sizes = [8, 1], strides = [1, 1]} : vector<8x128xf32> to vector<8x1xf32>
    %17 = vector.extract_strided_slice %0 {offsets = [0, 16], sizes = [8, 1], strides = [1, 1]} : vector<8x128xf32> to vector<8x1xf32>
    %18 = vector.extract_strided_slice %0 {offsets = [0, 17], sizes = [8, 1], strides = [1, 1]} : vector<8x128xf32> to vector<8x1xf32>
    %19 = vector.extract_strided_slice %0 {offsets = [0, 18], sizes = [8, 1], strides = [1, 1]} : vector<8x128xf32> to vector<8x1xf32>
    %20 = vector.extract_strided_slice %0 {offsets = [0, 19], sizes = [8, 1], strides = [1, 1]} : vector<8x128xf32> to vector<8x1xf32>
    %21 = vector.extract_strided_slice %0 {offsets = [0, 20], sizes = [8, 1], strides = [1, 1]} : vector<8x128xf32> to vector<8x1xf32>
    %22 = vector.extract_strided_slice %0 {offsets = [0, 21], sizes = [8, 1], strides = [1, 1]} : vector<8x128xf32> to vector<8x1xf32>
    %23 = vector.extract_strided_slice %0 {offsets = [0, 22], sizes = [8, 1], strides = [1, 1]} : vector<8x128xf32> to vector<8x1xf32>
    %24 = vector.extract_strided_slice %0 {offsets = [0, 23], sizes = [8, 1], strides = [1, 1]} : vector<8x128xf32> to vector<8x1xf32>
    %25 = vector.extract_strided_slice %0 {offsets = [0, 24], sizes = [8, 1], strides = [1, 1]} : vector<8x128xf32> to vector<8x1xf32>
    %26 = vector.extract_strided_slice %0 {offsets = [0, 25], sizes = [8, 1], strides = [1, 1]} : vector<8x128xf32> to vector<8x1xf32>
    %27 = vector.extract_strided_slice %0 {offsets = [0, 26], sizes = [8, 1], strides = [1, 1]} : vector<8x128xf32> to vector<8x1xf32>
    %28 = vector.extract_strided_slice %0 {offsets = [0, 27], sizes = [8, 1], strides = [1, 1]} : vector<8x128xf32> to vector<8x1xf32>
    %29 = vector.extract_strided_slice %0 {offsets = [0, 28], sizes = [8, 1], strides = [1, 1]} : vector<8x128xf32> to vector<8x1xf32>
    %30 = vector.extract_strided_slice %0 {offsets = [0, 29], sizes = [8, 1], strides = [1, 1]} : vector<8x128xf32> to vector<8x1xf32>
    %31 = vector.extract_strided_slice %0 {offsets = [0, 30], sizes = [8, 1], strides = [1, 1]} : vector<8x128xf32> to vector<8x1xf32>
    %32 = vector.extract_strided_slice %0 {offsets = [0, 31], sizes = [8, 1], strides = [1, 1]} : vector<8x128xf32> to vector<8x1xf32>
    %33 = vector.extract_strided_slice %0 {offsets = [0, 32], sizes = [8, 1], strides = [1, 1]} : vector<8x128xf32> to vector<8x1xf32>
    %34 = vector.extract_strided_slice %0 {offsets = [0, 33], sizes = [8, 1], strides = [1, 1]} : vector<8x128xf32> to vector<8x1xf32>
    %35 = vector.extract_strided_slice %0 {offsets = [0, 34], sizes = [8, 1], strides = [1, 1]} : vector<8x128xf32> to vector<8x1xf32>
    %36 = vector.extract_strided_slice %0 {offsets = [0, 35], sizes = [8, 1], strides = [1, 1]} : vector<8x128xf32> to vector<8x1xf32>
    %37 = vector.extract_strided_slice %0 {offsets = [0, 36], sizes = [8, 1], strides = [1, 1]} : vector<8x128xf32> to vector<8x1xf32>
    %38 = vector.extract_strided_slice %0 {offsets = [0, 37], sizes = [8, 1], strides = [1, 1]} : vector<8x128xf32> to vector<8x1xf32>
    %39 = vector.extract_strided_slice %0 {offsets = [0, 38], sizes = [8, 1], strides = [1, 1]} : vector<8x128xf32> to vector<8x1xf32>
    %40 = vector.extract_strided_slice %0 {offsets = [0, 39], sizes = [8, 1], strides = [1, 1]} : vector<8x128xf32> to vector<8x1xf32>
    %41 = vector.extract_strided_slice %0 {offsets = [0, 40], sizes = [8, 1], strides = [1, 1]} : vector<8x128xf32> to vector<8x1xf32>
    %42 = vector.extract_strided_slice %0 {offsets = [0, 41], sizes = [8, 1], strides = [1, 1]} : vector<8x128xf32> to vector<8x1xf32>
    %43 = vector.extract_strided_slice %0 {offsets = [0, 42], sizes = [8, 1], strides = [1, 1]} : vector<8x128xf32> to vector<8x1xf32>
    %44 = vector.extract_strided_slice %0 {offsets = [0, 43], sizes = [8, 1], strides = [1, 1]} : vector<8x128xf32> to vector<8x1xf32>
    %45 = vector.extract_strided_slice %0 {offsets = [0, 44], sizes = [8, 1], strides = [1, 1]} : vector<8x128xf32> to vector<8x1xf32>
    %46 = vector.extract_strided_slice %0 {offsets = [0, 45], sizes = [8, 1], strides = [1, 1]} : vector<8x128xf32> to vector<8x1xf32>
    %47 = vector.extract_strided_slice %0 {offsets = [0, 46], sizes = [8, 1], strides = [1, 1]} : vector<8x128xf32> to vector<8x1xf32>
    %48 = vector.extract_strided_slice %0 {offsets = [0, 47], sizes = [8, 1], strides = [1, 1]} : vector<8x128xf32> to vector<8x1xf32>
    %49 = vector.extract_strided_slice %0 {offsets = [0, 48], sizes = [8, 1], strides = [1, 1]} : vector<8x128xf32> to vector<8x1xf32>
    %50 = vector.extract_strided_slice %0 {offsets = [0, 49], sizes = [8, 1], strides = [1, 1]} : vector<8x128xf32> to vector<8x1xf32>
    %51 = vector.extract_strided_slice %0 {offsets = [0, 50], sizes = [8, 1], strides = [1, 1]} : vector<8x128xf32> to vector<8x1xf32>
    %52 = vector.extract_strided_slice %0 {offsets = [0, 51], sizes = [8, 1], strides = [1, 1]} : vector<8x128xf32> to vector<8x1xf32>
    %53 = vector.extract_strided_slice %0 {offsets = [0, 52], sizes = [8, 1], strides = [1, 1]} : vector<8x128xf32> to vector<8x1xf32>
    %54 = vector.extract_strided_slice %0 {offsets = [0, 53], sizes = [8, 1], strides = [1, 1]} : vector<8x128xf32> to vector<8x1xf32>
    %55 = vector.extract_strided_slice %0 {offsets = [0, 54], sizes = [8, 1], strides = [1, 1]} : vector<8x128xf32> to vector<8x1xf32>
    %56 = vector.extract_strided_slice %0 {offsets = [0, 55], sizes = [8, 1], strides = [1, 1]} : vector<8x128xf32> to vector<8x1xf32>
    %57 = vector.extract_strided_slice %0 {offsets = [0, 56], sizes = [8, 1], strides = [1, 1]} : vector<8x128xf32> to vector<8x1xf32>
    %58 = vector.extract_strided_slice %0 {offsets = [0, 57], sizes = [8, 1], strides = [1, 1]} : vector<8x128xf32> to vector<8x1xf32>
    %59 = vector.extract_strided_slice %0 {offsets = [0, 58], sizes = [8, 1], strides = [1, 1]} : vector<8x128xf32> to vector<8x1xf32>
    %c0_1 = arith.constant 0 : index
    %c0_2 = arith.constant 0 : index
    %c0_3 = arith.constant 0 : index
    %60 = vector.load %arg4[%c0_1, %c0_2, %c0_3] : memref<1x8x128xf32, #tpu.memory_space<vmem>>, vector<1x8x128xf32>
    %61 = vector.shape_cast %60 : vector<1x8x128xf32> to vector<8x128xf32>
    %62 = vector.broadcast %1 : vector<8x1xf32> to vector<8x128xf32>
    %63 = arith.subf %61, %62 : vector<8x128xf32>
    %64 = math.roundeven %63 : vector<8x128xf32>
    %65 = vector.broadcast %1 : vector<8x1xf32> to vector<8x128xf32>
    %66 = arith.addf %64, %65 : vector<8x128xf32>
    %c0_4 = arith.constant 0 : index
    %c0_5 = arith.constant 0 : index
    %c0_6 = arith.constant 0 : index
    %67 = vector.load %arg5[%c0_4, %c0_5, %c0_6] : memref<1x8x128xf32, #tpu.memory_space<vmem>>, vector<1x8x128xf32>
    %68 = vector.shape_cast %67 : vector<1x8x128xf32> to vector<8x128xf32>
    %69 = vector.shape_cast %66 : vector<8x128xf32> to vector<1x8x128xf32>
    tpu.vector_store %arg5[%c0_4, %c0_5, %c0_6], %69 {strides = array<i32>} : memref<1x8x128xf32, #tpu.memory_space<vmem>>, vector<1x8x128xf32>,
    %cst = arith.constant 5.000000e-01 : f32
    %70 = vector.broadcast %cst : f32 to vector<8x128xf32>
    %71 = arith.subf %66, %70 : vector<8x128xf32>
    %72 = vector.broadcast %2 : vector<8x1xf32> to vector<8x128xf32>
    %73 = arith.mulf %72, %71 : vector<8x128xf32>
    %74 = vector.broadcast %35 : vector<8x1xf32> to vector<8x128xf32>
    %75 = arith.addf %74, %73 : vector<8x128xf32>
    %76 = vector.broadcast %2 : vector<8x1xf32> to vector<8x128xf32>
    %77 = arith.addf %75, %76 : vector<8x128xf32>
    %78 = math.tanh %75 : vector<8x128xf32>
    %79 = vector.broadcast %48 : vector<8x1xf32> to vector<8x128xf32>
    %80 = arith.mulf %79, %78 : vector<8x128xf32>
    %81 = arith.addf %75, %80 : vector<8x128xf32>
    %82 = math.tanh %77 : vector<8x128xf32>
    %83 = vector.broadcast %48 : vector<8x1xf32> to vector<8x128xf32>
    %84 = arith.mulf %83, %82 : vector<8x128xf32>
    %85 = arith.addf %77, %84 : vector<8x128xf32>
    %86 = vector.broadcast %3 : vector<8x1xf32> to vector<8x128xf32>
    %87 = arith.mulf %86, %71 : vector<8x128xf32>
    %88 = vector.broadcast %36 : vector<8x1xf32> to vector<8x128xf32>
    %89 = arith.addf %88, %87 : vector<8x128xf32>
    %90 = vector.broadcast %3 : vector<8x1xf32> to vector<8x128xf32>
    %91 = arith.addf %89, %90 : vector<8x128xf32>
    %92 = math.tanh %89 : vector<8x128xf32>
    %93 = vector.broadcast %49 : vector<8x1xf32> to vector<8x128xf32>
    %94 = arith.mulf %93, %92 : vector<8x128xf32>
    %95 = arith.addf %89, %94 : vector<8x128xf32>
    %96 = math.tanh %91 : vector<8x128xf32>
    %97 = vector.broadcast %49 : vector<8x1xf32> to vector<8x128xf32>
    %98 = arith.mulf %97, %96 : vector<8x128xf32>
    %99 = arith.addf %91, %98 : vector<8x128xf32>
    %100 = vector.broadcast %4 : vector<8x1xf32> to vector<8x128xf32>
    %101 = arith.mulf %100, %71 : vector<8x128xf32>
    %102 = vector.broadcast %37 : vector<8x1xf32> to vector<8x128xf32>
    %103 = arith.addf %102, %101 : vector<8x128xf32>
    %104 = vector.broadcast %4 : vector<8x1xf32> to vector<8x128xf32>
    %105 = arith.addf %103, %104 : vector<8x128xf32>
    %106 = math.tanh %103 : vector<8x128xf32>
    %107 = vector.broadcast %50 : vector<8x1xf32> to vector<8x128xf32>
    %108 = arith.mulf %107, %106 : vector<8x128xf32>
    %109 = arith.addf %103, %108 : vector<8x128xf32>
    %110 = math.tanh %105 : vector<8x128xf32>
    %111 = vector.broadcast %50 : vector<8x1xf32> to vector<8x128xf32>
    %112 = arith.mulf %111, %110 : vector<8x128xf32>
    %113 = arith.addf %105, %112 : vector<8x128xf32>
    %114 = vector.broadcast %5 : vector<8x1xf32> to vector<8x128xf32>
    %115 = arith.mulf %114, %81 : vector<8x128xf32>
    %116 = vector.broadcast %38 : vector<8x1xf32> to vector<8x128xf32>
    %117 = arith.addf %116, %115 : vector<8x128xf32>
    %118 = vector.broadcast %5 : vector<8x1xf32> to vector<8x128xf32>
    %119 = arith.mulf %118, %85 : vector<8x128xf32>
    %120 = vector.broadcast %38 : vector<8x1xf32> to vector<8x128xf32>
    %121 = arith.addf %120, %119 : vector<8x128xf32>
    %122 = vector.broadcast %6 : vector<8x1xf32> to vector<8x128xf32>
    %123 = arith.mulf %122, %95 : vector<8x128xf32>
    %124 = arith.addf %117, %123 : vector<8x128xf32>
    %125 = vector.broadcast %6 : vector<8x1xf32> to vector<8x128xf32>
    %126 = arith.mulf %125, %99 : vector<8x128xf32>
    %127 = arith.addf %121, %126 : vector<8x128xf32>
    %128 = vector.broadcast %7 : vector<8x1xf32> to vector<8x128xf32>
    %129 = arith.mulf %128, %109 : vector<8x128xf32>
    %130 = arith.addf %124, %129 : vector<8x128xf32>
    %131 = vector.broadcast %7 : vector<8x1xf32> to vector<8x128xf32>
    %132 = arith.mulf %131, %113 : vector<8x128xf32>
    %133 = arith.addf %127, %132 : vector<8x128xf32>
    %134 = math.tanh %130 : vector<8x128xf32>
    %135 = vector.broadcast %51 : vector<8x1xf32> to vector<8x128xf32>
    %136 = arith.mulf %135, %134 : vector<8x128xf32>
    %137 = arith.addf %130, %136 : vector<8x128xf32>
    %138 = math.tanh %133 : vector<8x128xf32>
    %139 = vector.broadcast %51 : vector<8x1xf32> to vector<8x128xf32>
    %140 = arith.mulf %139, %138 : vector<8x128xf32>
    %141 = arith.addf %133, %140 : vector<8x128xf32>
    %142 = vector.broadcast %8 : vector<8x1xf32> to vector<8x128xf32>
    %143 = arith.mulf %142, %81 : vector<8x128xf32>
    %144 = vector.broadcast %39 : vector<8x1xf32> to vector<8x128xf32>
    %145 = arith.addf %144, %143 : vector<8x128xf32>
    %146 = vector.broadcast %8 : vector<8x1xf32> to vector<8x128xf32>
    %147 = arith.mulf %146, %85 : vector<8x128xf32>
    %148 = vector.broadcast %39 : vector<8x1xf32> to vector<8x128xf32>
    %149 = arith.addf %148, %147 : vector<8x128xf32>
    %150 = vector.broadcast %9 : vector<8x1xf32> to vector<8x128xf32>
    %151 = arith.mulf %150, %95 : vector<8x128xf32>
    %152 = arith.addf %145, %151 : vector<8x128xf32>
    %153 = vector.broadcast %9 : vector<8x1xf32> to vector<8x128xf32>
    %154 = arith.mulf %153, %99 : vector<8x128xf32>
    %155 = arith.addf %149, %154 : vector<8x128xf32>
    %156 = vector.broadcast %10 : vector<8x1xf32> to vector<8x128xf32>
    %157 = arith.mulf %156, %109 : vector<8x128xf32>
    %158 = arith.addf %152, %157 : vector<8x128xf32>
    %159 = vector.broadcast %10 : vector<8x1xf32> to vector<8x128xf32>
    %160 = arith.mulf %159, %113 : vector<8x128xf32>
    %161 = arith.addf %155, %160 : vector<8x128xf32>
    %162 = math.tanh %158 : vector<8x128xf32>
    %163 = vector.broadcast %52 : vector<8x1xf32> to vector<8x128xf32>
    %164 = arith.mulf %163, %162 : vector<8x128xf32>
    %165 = arith.addf %158, %164 : vector<8x128xf32>
    %166 = math.tanh %161 : vector<8x128xf32>
    %167 = vector.broadcast %52 : vector<8x1xf32> to vector<8x128xf32>
    %168 = arith.mulf %167, %166 : vector<8x128xf32>
    %169 = arith.addf %161, %168 : vector<8x128xf32>
    %170 = vector.broadcast %11 : vector<8x1xf32> to vector<8x128xf32>
    %171 = arith.mulf %170, %81 : vector<8x128xf32>
    %172 = vector.broadcast %40 : vector<8x1xf32> to vector<8x128xf32>
    %173 = arith.addf %172, %171 : vector<8x128xf32>
    %174 = vector.broadcast %11 : vector<8x1xf32> to vector<8x128xf32>
    %175 = arith.mulf %174, %85 : vector<8x128xf32>
    %176 = vector.broadcast %40 : vector<8x1xf32> to vector<8x128xf32>
    %177 = arith.addf %176, %175 : vector<8x128xf32>
    %178 = vector.broadcast %12 : vector<8x1xf32> to vector<8x128xf32>
    %179 = arith.mulf %178, %95 : vector<8x128xf32>
    %180 = arith.addf %173, %179 : vector<8x128xf32>
    %181 = vector.broadcast %12 : vector<8x1xf32> to vector<8x128xf32>
    %182 = arith.mulf %181, %99 : vector<8x128xf32>
    %183 = arith.addf %177, %182 : vector<8x128xf32>
    %184 = vector.broadcast %13 : vector<8x1xf32> to vector<8x128xf32>
    %185 = arith.mulf %184, %109 : vector<8x128xf32>
    %186 = arith.addf %180, %185 : vector<8x128xf32>
    %187 = vector.broadcast %13 : vector<8x1xf32> to vector<8x128xf32>
    %188 = arith.mulf %187, %113 : vector<8x128xf32>
    %189 = arith.addf %183, %188 : vector<8x128xf32>
    %190 = math.tanh %186 : vector<8x128xf32>
    %191 = vector.broadcast %53 : vector<8x1xf32> to vector<8x128xf32>
    %192 = arith.mulf %191, %190 : vector<8x128xf32>
    %193 = arith.addf %186, %192 : vector<8x128xf32>
    %194 = math.tanh %189 : vector<8x128xf32>
    %195 = vector.broadcast %53 : vector<8x1xf32> to vector<8x128xf32>
    %196 = arith.mulf %195, %194 : vector<8x128xf32>
    %197 = arith.addf %189, %196 : vector<8x128xf32>
    %198 = vector.broadcast %14 : vector<8x1xf32> to vector<8x128xf32>
    %199 = arith.mulf %198, %137 : vector<8x128xf32>
    %200 = vector.broadcast %41 : vector<8x1xf32> to vector<8x128xf32>
    %201 = arith.addf %200, %199 : vector<8x128xf32>
    %202 = vector.broadcast %14 : vector<8x1xf32> to vector<8x128xf32>
    %203 = arith.mulf %202, %141 : vector<8x128xf32>
    %204 = vector.broadcast %41 : vector<8x1xf32> to vector<8x128xf32>
    %205 = arith.addf %204, %203 : vector<8x128xf32>
    %206 = vector.broadcast %15 : vector<8x1xf32> to vector<8x128xf32>
    %207 = arith.mulf %206, %165 : vector<8x128xf32>
    %208 = arith.addf %201, %207 : vector<8x128xf32>
    %209 = vector.broadcast %15 : vector<8x1xf32> to vector<8x128xf32>
    %210 = arith.mulf %209, %169 : vector<8x128xf32>
    %211 = arith.addf %205, %210 : vector<8x128xf32>
    %212 = vector.broadcast %16 : vector<8x1xf32> to vector<8x128xf32>
    %213 = arith.mulf %212, %193 : vector<8x128xf32>
    %214 = arith.addf %208, %213 : vector<8x128xf32>
    %215 = vector.broadcast %16 : vector<8x1xf32> to vector<8x128xf32>
    %216 = arith.mulf %215, %197 : vector<8x128xf32>
    %217 = arith.addf %211, %216 : vector<8x128xf32>
    %218 = math.tanh %214 : vector<8x128xf32>
    %219 = vector.broadcast %54 : vector<8x1xf32> to vector<8x128xf32>
    %220 = arith.mulf %219, %218 : vector<8x128xf32>
    %221 = arith.addf %214, %220 : vector<8x128xf32>
    %222 = math.tanh %217 : vector<8x128xf32>
    %223 = vector.broadcast %54 : vector<8x1xf32> to vector<8x128xf32>
    %224 = arith.mulf %223, %222 : vector<8x128xf32>
    %225 = arith.addf %217, %224 : vector<8x128xf32>
    %226 = vector.broadcast %17 : vector<8x1xf32> to vector<8x128xf32>
    %227 = arith.mulf %226, %137 : vector<8x128xf32>
    %228 = vector.broadcast %42 : vector<8x1xf32> to vector<8x128xf32>
    %229 = arith.addf %228, %227 : vector<8x128xf32>
    %230 = vector.broadcast %17 : vector<8x1xf32> to vector<8x128xf32>
    %231 = arith.mulf %230, %141 : vector<8x128xf32>
    %232 = vector.broadcast %42 : vector<8x1xf32> to vector<8x128xf32>
    %233 = arith.addf %232, %231 : vector<8x128xf32>
    %234 = vector.broadcast %18 : vector<8x1xf32> to vector<8x128xf32>
    %235 = arith.mulf %234, %165 : vector<8x128xf32>
    %236 = arith.addf %229, %235 : vector<8x128xf32>
    %237 = vector.broadcast %18 : vector<8x1xf32> to vector<8x128xf32>
    %238 = arith.mulf %237, %169 : vector<8x128xf32>
    %239 = arith.addf %233, %238 : vector<8x128xf32>
    %240 = vector.broadcast %19 : vector<8x1xf32> to vector<8x128xf32>
    %241 = arith.mulf %240, %193 : vector<8x128xf32>
    %242 = arith.addf %236, %241 : vector<8x128xf32>
    %243 = vector.broadcast %19 : vector<8x1xf32> to vector<8x128xf32>
    %244 = arith.mulf %243, %197 : vector<8x128xf32>
    %245 = arith.addf %239, %244 : vector<8x128xf32>
    %246 = math.tanh %242 : vector<8x128xf32>
    %247 = vector.broadcast %55 : vector<8x1xf32> to vector<8x128xf32>
    %248 = arith.mulf %247, %246 : vector<8x128xf32>
    %249 = arith.addf %242, %248 : vector<8x128xf32>
    %250 = math.tanh %245 : vector<8x128xf32>
    %251 = vector.broadcast %55 : vector<8x1xf32> to vector<8x128xf32>
    %252 = arith.mulf %251, %250 : vector<8x128xf32>
    %253 = arith.addf %245, %252 : vector<8x128xf32>
    %254 = vector.broadcast %20 : vector<8x1xf32> to vector<8x128xf32>
    %255 = arith.mulf %254, %137 : vector<8x128xf32>
    %256 = vector.broadcast %43 : vector<8x1xf32> to vector<8x128xf32>
    %257 = arith.addf %256, %255 : vector<8x128xf32>
    %258 = vector.broadcast %20 : vector<8x1xf32> to vector<8x128xf32>
    %259 = arith.mulf %258, %141 : vector<8x128xf32>
    %260 = vector.broadcast %43 : vector<8x1xf32> to vector<8x128xf32>
    %261 = arith.addf %260, %259 : vector<8x128xf32>
    %262 = vector.broadcast %21 : vector<8x1xf32> to vector<8x128xf32>
    %263 = arith.mulf %262, %165 : vector<8x128xf32>
    %264 = arith.addf %257, %263 : vector<8x128xf32>
    %265 = vector.broadcast %21 : vector<8x1xf32> to vector<8x128xf32>
    %266 = arith.mulf %265, %169 : vector<8x128xf32>
    %267 = arith.addf %261, %266 : vector<8x128xf32>
    %268 = vector.broadcast %22 : vector<8x1xf32> to vector<8x128xf32>
    %269 = arith.mulf %268, %193 : vector<8x128xf32>
    %270 = arith.addf %264, %269 : vector<8x128xf32>
    %271 = vector.broadcast %22 : vector<8x1xf32> to vector<8x128xf32>
    %272 = arith.mulf %271, %197 : vector<8x128xf32>
    %273 = arith.addf %267, %272 : vector<8x128xf32>
    %274 = math.tanh %270 : vector<8x128xf32>
    %275 = vector.broadcast %56 : vector<8x1xf32> to vector<8x128xf32>
    %276 = arith.mulf %275, %274 : vector<8x128xf32>
    %277 = arith.addf %270, %276 : vector<8x128xf32>
    %278 = math.tanh %273 : vector<8x128xf32>
    %279 = vector.broadcast %56 : vector<8x1xf32> to vector<8x128xf32>
    %280 = arith.mulf %279, %278 : vector<8x128xf32>
    %281 = arith.addf %273, %280 : vector<8x128xf32>
    %282 = vector.broadcast %23 : vector<8x1xf32> to vector<8x128xf32>
    %283 = arith.mulf %282, %221 : vector<8x128xf32>
    %284 = vector.broadcast %44 : vector<8x1xf32> to vector<8x128xf32>
    %285 = arith.addf %284, %283 : vector<8x128xf32>
    %286 = vector.broadcast %23 : vector<8x1xf32> to vector<8x128xf32>
    %287 = arith.mulf %286, %225 : vector<8x128xf32>
    %288 = vector.broadcast %44 : vector<8x1xf32> to vector<8x128xf32>
    %289 = arith.addf %288, %287 : vector<8x128xf32>
    %290 = vector.broadcast %24 : vector<8x1xf32> to vector<8x128xf32>
    %291 = arith.mulf %290, %249 : vector<8x128xf32>
    %292 = arith.addf %285, %291 : vector<8x128xf32>
    %293 = vector.broadcast %24 : vector<8x1xf32> to vector<8x128xf32>
    %294 = arith.mulf %293, %253 : vector<8x128xf32>
    %295 = arith.addf %289, %294 : vector<8x128xf32>
    %296 = vector.broadcast %25 : vector<8x1xf32> to vector<8x128xf32>
    %297 = arith.mulf %296, %277 : vector<8x128xf32>
    %298 = arith.addf %292, %297 : vector<8x128xf32>
    %299 = vector.broadcast %25 : vector<8x1xf32> to vector<8x128xf32>
    %300 = arith.mulf %299, %281 : vector<8x128xf32>
    %301 = arith.addf %295, %300 : vector<8x128xf32>
    %302 = math.tanh %298 : vector<8x128xf32>
    %303 = vector.broadcast %57 : vector<8x1xf32> to vector<8x128xf32>
    %304 = arith.mulf %303, %302 : vector<8x128xf32>
    %305 = arith.addf %298, %304 : vector<8x128xf32>
    %306 = math.tanh %301 : vector<8x128xf32>
    %307 = vector.broadcast %57 : vector<8x1xf32> to vector<8x128xf32>
    %308 = arith.mulf %307, %306 : vector<8x128xf32>
    %309 = arith.addf %301, %308 : vector<8x128xf32>
    %310 = vector.broadcast %26 : vector<8x1xf32> to vector<8x128xf32>
    %311 = arith.mulf %310, %221 : vector<8x128xf32>
    %312 = vector.broadcast %45 : vector<8x1xf32> to vector<8x128xf32>
    %313 = arith.addf %312, %311 : vector<8x128xf32>
    %314 = vector.broadcast %26 : vector<8x1xf32> to vector<8x128xf32>
    %315 = arith.mulf %314, %225 : vector<8x128xf32>
    %316 = vector.broadcast %45 : vector<8x1xf32> to vector<8x128xf32>
    %317 = arith.addf %316, %315 : vector<8x128xf32>
    %318 = vector.broadcast %27 : vector<8x1xf32> to vector<8x128xf32>
    %319 = arith.mulf %318, %249 : vector<8x128xf32>
    %320 = arith.addf %313, %319 : vector<8x128xf32>
    %321 = vector.broadcast %27 : vector<8x1xf32> to vector<8x128xf32>
    %322 = arith.mulf %321, %253 : vector<8x128xf32>
    %323 = arith.addf %317, %322 : vector<8x128xf32>
    %324 = vector.broadcast %28 : vector<8x1xf32> to vector<8x128xf32>
    %325 = arith.mulf %324, %277 : vector<8x128xf32>
    %326 = arith.addf %320, %325 : vector<8x128xf32>
    %327 = vector.broadcast %28 : vector<8x1xf32> to vector<8x128xf32>
    %328 = arith.mulf %327, %281 : vector<8x128xf32>
    %329 = arith.addf %323, %328 : vector<8x128xf32>
    %330 = math.tanh %326 : vector<8x128xf32>
    %331 = vector.broadcast %58 : vector<8x1xf32> to vector<8x128xf32>
    %332 = arith.mulf %331, %330 : vector<8x128xf32>
    %333 = arith.addf %326, %332 : vector<8x128xf32>
    %334 = math.tanh %329 : vector<8x128xf32>
    %335 = vector.broadcast %58 : vector<8x1xf32> to vector<8x128xf32>
    %336 = arith.mulf %335, %334 : vector<8x128xf32>
    %337 = arith.addf %329, %336 : vector<8x128xf32>
    %338 = vector.broadcast %29 : vector<8x1xf32> to vector<8x128xf32>
    %339 = arith.mulf %338, %221 : vector<8x128xf32>
    %340 = vector.broadcast %46 : vector<8x1xf32> to vector<8x128xf32>
    %341 = arith.addf %340, %339 : vector<8x128xf32>
    %342 = vector.broadcast %29 : vector<8x1xf32> to vector<8x128xf32>
    %343 = arith.mulf %342, %225 : vector<8x128xf32>
    %344 = vector.broadcast %46 : vector<8x1xf32> to vector<8x128xf32>
    %345 = arith.addf %344, %343 : vector<8x128xf32>
    %346 = vector.broadcast %30 : vector<8x1xf32> to vector<8x128xf32>
    %347 = arith.mulf %346, %249 : vector<8x128xf32>
    %348 = arith.addf %341, %347 : vector<8x128xf32>
    %349 = vector.broadcast %30 : vector<8x1xf32> to vector<8x128xf32>
    %350 = arith.mulf %349, %253 : vector<8x128xf32>
    %351 = arith.addf %345, %350 : vector<8x128xf32>
    %352 = vector.broadcast %31 : vector<8x1xf32> to vector<8x128xf32>
    %353 = arith.mulf %352, %277 : vector<8x128xf32>
    %354 = arith.addf %348, %353 : vector<8x128xf32>
    %355 = vector.broadcast %31 : vector<8x1xf32> to vector<8x128xf32>
    %356 = arith.mulf %355, %281 : vector<8x128xf32>
    %357 = arith.addf %351, %356 : vector<8x128xf32>
    %358 = math.tanh %354 : vector<8x128xf32>
    %359 = vector.broadcast %59 : vector<8x1xf32> to vector<8x128xf32>
    %360 = arith.mulf %359, %358 : vector<8x128xf32>
    %361 = arith.addf %354, %360 : vector<8x128xf32>
    %362 = math.tanh %357 : vector<8x128xf32>
    %363 = vector.broadcast %59 : vector<8x1xf32> to vector<8x128xf32>
    %364 = arith.mulf %363, %362 : vector<8x128xf32>
    %365 = arith.addf %357, %364 : vector<8x128xf32>
    %366 = vector.broadcast %32 : vector<8x1xf32> to vector<8x128xf32>
    %367 = arith.mulf %366, %305 : vector<8x128xf32>
    %368 = vector.broadcast %47 : vector<8x1xf32> to vector<8x128xf32>
    %369 = arith.addf %368, %367 : vector<8x128xf32>
    %370 = vector.broadcast %32 : vector<8x1xf32> to vector<8x128xf32>
    %371 = arith.mulf %370, %309 : vector<8x128xf32>
    %372 = vector.broadcast %47 : vector<8x1xf32> to vector<8x128xf32>
    %373 = arith.addf %372, %371 : vector<8x128xf32>
    %374 = vector.broadcast %33 : vector<8x1xf32> to vector<8x128xf32>
    %375 = arith.mulf %374, %333 : vector<8x128xf32>
    %376 = arith.addf %369, %375 : vector<8x128xf32>
    %377 = vector.broadcast %33 : vector<8x1xf32> to vector<8x128xf32>
    %378 = arith.mulf %377, %337 : vector<8x128xf32>
    %379 = arith.addf %373, %378 : vector<8x128xf32>
    %380 = vector.broadcast %34 : vector<8x1xf32> to vector<8x128xf32>
    %381 = arith.mulf %380, %361 : vector<8x128xf32>
    %382 = arith.addf %376, %381 : vector<8x128xf32>
    %383 = vector.broadcast %34 : vector<8x1xf32> to vector<8x128xf32>
    %384 = arith.mulf %383, %365 : vector<8x128xf32>
    %385 = arith.addf %379, %384 : vector<8x128xf32>
    %386 = arith.addf %382, %385 : vector<8x128xf32>
    %cst_7 = arith.constant 0.000000e+00 : f32
    %387 = vector.broadcast %cst_7 : f32 to vector<8x128xf32>
    %388 = arith.cmpf ogt, %386, %387 : vector<8x128xf32>
    %cst_8 = arith.constant 0.000000e+00 : f32
    %389 = vector.broadcast %cst_8 : f32 to vector<8x128xf32>
    %390 = arith.cmpf olt, %386, %389 : vector<8x128xf32>
    %cst_9 = arith.constant 1.000000e+00 : f32
    %cst_10 = arith.constant 0.000000e+00 : f32
    %391 = vector.broadcast %cst_9 : f32 to vector<8x128xf32>
    %392 = vector.broadcast %cst_10 : f32 to vector<8x128xf32>
    %393 = arith.select %390, %391, %392 : vector<8x128xi1>, vector<8x128xf32>
    %cst_11 = arith.constant -1.000000e+00 : f32
    %394 = vector.broadcast %cst_11 : f32 to vector<8x128xf32>
    %395 = arith.select %388, %394, %393 : vector<8x128xi1>, vector<8x128xf32>
    %396 = arith.mulf %395, %385 : vector<8x128xf32>
    %397 = arith.negf %396 : vector<8x128xf32>
    %398 = math.exp %397 : vector<8x128xf32>
    %cst_12 = arith.constant 1.000000e+00 : f32
    %399 = vector.broadcast %cst_12 : f32 to vector<8x128xf32>
    %400 = arith.addf %399, %398 : vector<8x128xf32>
    %401 = arith.divf %399, %400 : vector<8x128xf32>
    %402 = arith.mulf %395, %382 : vector<8x128xf32>
    %403 = arith.negf %402 : vector<8x128xf32>
    %404 = math.exp %403 : vector<8x128xf32>
    %cst_13 = arith.constant 1.000000e+00 : f32
    %405 = vector.broadcast %cst_13 : f32 to vector<8x128xf32>
    %406 = arith.addf %405, %404 : vector<8x128xf32>
    %407 = arith.divf %405, %406 : vector<8x128xf32>
    %408 = arith.subf %401, %407 : vector<8x128xf32>
    %409 = math.absf %408 : vector<8x128xf32>
    %cst_14 = arith.constant 9.99999971E-10 : f32
    %410 = vector.broadcast %cst_14 : f32 to vector<8x128xf32>
    %411 = arith.maximumf %409, %410 : vector<8x128xf32>
    %c0_15 = arith.constant 0 : index
    %c0_16 = arith.constant 0 : index
    %c0_17 = arith.constant 0 : index
    %412 = vector.load %arg6[%c0_15, %c0_16, %c0_17] : memref<1x8x128xf32, #tpu.memory_space<vmem>>, vector<1x8x128xf32>
    %413 = vector.shape_cast %412 : vector<1x8x128xf32> to vector<8x128xf32>
    %414 = vector.shape_cast %411 : vector<8x128xf32> to vector<1x8x128xf32>
    tpu.vector_store %arg6[%c0_15, %c0_16, %c0_17], %414 {strides = array<i32>} : memref<1x8x128xf32, #tpu.memory_space<vmem>>, vector<1x8x128xf32>,
    return
  }
  func.func @transform_0(%arg0: i32, %arg1: i32, %arg2: i32) -> (i32, i32) {
    %c0_i32 = arith.constant 0 : i32
    %c0_i32_0 = arith.constant 0 : i32
    return %arg1, %c0_i32 : i32, i32
  }
  func.func @transform_1(%arg0: i32, %arg1: i32, %arg2: i32) -> (i32, i32, i32) {
    %c0_i32 = arith.constant 0 : i32
    return %arg0, %arg1, %arg2 : i32, i32, i32
  }
  func.func @transform_2(%arg0: i32, %arg1: i32, %arg2: i32) -> (i32, i32, i32) {
    %c0_i32 = arith.constant 0 : i32
    return %arg0, %arg1, %arg2 : i32, i32, i32
  }
  func.func @transform_3(%arg0: i32, %arg1: i32, %arg2: i32) -> (i32, i32, i32) {
    %c0_i32 = arith.constant 0 : i32
    return %arg0, %arg1, %arg2 : i32, i32, i32
  }
}

</mosaic_0001>

<llo_original>
// kernel: compression_model_forward.1
$region0: #{compression_model_forward.1}
  #allocation0 [shape = 'u32[]', space=smem, size = 0x4, offset = 0x4, fixed_abs, tag = 'smem constant byte address 0x4 - core index']
  #allocation1 [shape = 'u32[144,128]{1,0:T(1,128)}', space=vmem, size = 0x12000, scoped, tag = 'internal scratch']
  %s0 = inlined_call_operand.vmem [shape: f32[8,128], index: 0, kind: input, shape index: {}]
  %s1 = inlined_call_operand.vmem [shape: f32[2,8,256], index: 1, kind: input, shape index: {}]
  %s2 = inlined_call_operand.vmem [shape: f32[2,8,256], index: 2, kind: output, shape index: {0}]
  %s3 = inlined_call_operand.vmem [shape: f32[2,8,256], index: 3, kind: output, shape index: {1}]
  %4 = xla_tuple %s2, %s3
  %s5 = sld [smem:[#allocation0]]
  $region49: #{compression_model_forward.1} parent=0
    _
  %s7 = ssub.s32 1, %s5
  %s8 = scalar_select 0, %s7, %s5
  loop: start=0, step=1, limit=6
  $region2: #{compression_model_forward.1} parent=0 // loop_pre_header
    _
  $region3: #{compression_model_forward.1} parent=0 // loop_header
    %s10 = sphi 0, %s14
    %p11 = scmp.ge.s32.totalorder %s10, 6
    %s17 = sphi 0, %s36
    %s18 = sphi 0, %s32
    %s19 = sphi 0, %s28
    %s20 = sphi 0, %s17
    %s21 = sphi 0, %s18
    %s22 = sphi 0, %s19
    %s23 = sphi 0, %s20
    %s24 = sphi 0, %s21
    %s25 = sphi 0, %s22
    %s39 = sphi 0, %s41
    %s42 = sphi 0, %s39
    %s43 = sphi 0, %s42
    %s59 = sphi 0, %s43
    %s69 = sphi 0, %s71
    %s72 = sphi 0, %s69
    %s73 = sphi 0, %s72
    %s89 = sphi 0, %s73
    %s99 = sphi 0, %s101
    %s102 = sphi 0, %s99
    %s103 = sphi 0, %s102
    %s119 = sphi 0, %s103
    %s129 = sphi 0, %s131
    %s132 = sphi 0, %s129
    %s133 = sphi 0, %s132
    %s149 = sphi 0, %s133
  $region4: #{compression_model_forward.1} parent=0 // loop_header_branch
    %13 = sbr.rel (%p11) target = $region8
  $region5: #{compression_model_forward.1} parent=0 // loop_body
    %s15 = ssub.s32 %s10, 1
    %s16 = ssub.s32 %s10, 2
    %s26 = sadd.s32 1, %s19
    %p27 = scmp.ge.s32.totalorder %s26, 2
    %s28 = scalar_select %p27, 0, %s26
    %s29 = sadd.s32 1, %s18
    %s30 = scalar_select %p27, %s29, %s18
    %p31 = scmp.ge.s32.totalorder %s30, 1
    %s32 = scalar_select %p31, 0, %s30
    %s33 = sadd.s32 1, %s17
    %s34 = scalar_select %p31, %s33, %s17
    %p35 = scmp.ge.s32.totalorder %s34, 2
    %s36 = scalar_select %p35, 0, %s34
    %s37 = ssub.s32 %s18, %s32
    %p38 = scmp.eq.s32.totalorder %s37, 0
    %s40 = sadd.s32 %s39, 1
    %s41 = scalar_select %p38, %s39, %s40
    %p44 = pneg %p38
    %p45 = scmp.eq.s32.totalorder %s10, 3
    %p46 = por %p44, %p45
    %p47 = scmp.ne.s32.totalorder %s39, %s42
    %p48 = scmp.eq.s32.totalorder %s10, 0
    %p49 = por %p47, %p48
    %p50 = scmp.ne.s32.totalorder %s39, %s42
    %p51 = scmp.eq.s32.totalorder %s15, 3
    %p52 = por %p50, %p51
    %p53 = scmp.ne.s32.totalorder %s42, %s43
    %p54 = scmp.eq.s32.totalorder %s15, 0
    %p55 = por %p53, %p54
    %p56 = scmp.ne.s32.totalorder %s42, %s43
    %p57 = scmp.eq.s32.totalorder %s16, 3
    %p58 = por %p56, %p57
    %p60 = scmp.ne.s32.totalorder %s43, %s59
    %p61 = scmp.eq.s32.totalorder %s16, 0
    %p62 = por %p60, %p61
    %s63 = ssub.s32 %s17, %s36
    %s64 = ssub.s32 %s18, %s32
    %s65 = sor.u32 %s63, %s64
    %s66 = ssub.s32 %s19, %s28
    %s67 = sor.u32 %s65, %s66
    %p68 = scmp.eq.s32.totalorder %s67, 0
    %s70 = sadd.s32 %s69, 1
    %s71 = scalar_select %p68, %s69, %s70
    %p74 = pneg %p68
    %p75 = scmp.eq.s32.totalorder %s10, 3
    %p76 = por %p74, %p75
    %p77 = scmp.ne.s32.totalorder %s69, %s72
    %p78 = scmp.eq.s32.totalorder %s10, 0
    %p79 = por %p77, %p78
    %p80 = scmp.ne.s32.totalorder %s69, %s72
    %p81 = scmp.eq.s32.totalorder %s15, 3
    %p82 = por %p80, %p81
    %p83 = scmp.ne.s32.totalorder %s72, %s73
    %p84 = scmp.eq.s32.totalorder %s15, 0
    %p85 = por %p83, %p84
    %p86 = scmp.ne.s32.totalorder %s72, %s73
    %p87 = scmp.eq.s32.totalorder %s16, 3
    %p88 = por %p86, %p87
    %p90 = scmp.ne.s32.totalorder %s73, %s89
    %p91 = scmp.eq.s32.totalorder %s16, 0
    %p92 = por %p90, %p91
    %s93 = ssub.s32 %s17, %s36
    %s94 = ssub.s32 %s18, %s32
    %s95 = sor.u32 %s93, %s94
    %s96 = ssub.s32 %s19, %s28
    %s97 = sor.u32 %s95, %s96
    %p98 = scmp.eq.s32.totalorder %s97, 0
    %s100 = sadd.s32 %s99, 1
    %s101 = scalar_select %p98, %s99, %s100
    %p104 = pneg %p98
    %p105 = scmp.eq.s32.totalorder %s10, 3
    %p106 = por %p104, %p105
    %p107 = scmp.ne.s32.totalorder %s99, %s102
    %p108 = scmp.eq.s32.totalorder %s10, 0
    %p109 = por %p107, %p108
    %p110 = scmp.ne.s32.totalorder %s99, %s102
    %p111 = scmp.eq.s32.totalorder %s15, 3
    %p112 = por %p110, %p111
    %p113 = scmp.ne.s32.totalorder %s102, %s103
    %p114 = scmp.eq.s32.totalorder %s15, 0
    %p115 = por %p113, %p114
    %p116 = scmp.ne.s32.totalorder %s102, %s103
    %p117 = scmp.eq.s32.totalorder %s16, 3
    %p118 = por %p116, %p117
    %p120 = scmp.ne.s32.totalorder %s103, %s119
    %p121 = scmp.eq.s32.totalorder %s16, 0
    %p122 = por %p120, %p121
    %s123 = ssub.s32 %s17, %s36
    %s124 = ssub.s32 %s18, %s32
    %s125 = sor.u32 %s123, %s124
    %s126 = ssub.s32 %s19, %s28
    %s127 = sor.u32 %s125, %s126
    %p128 = scmp.eq.s32.totalorder %s127, 0
    %s130 = sadd.s32 %s129, 1
    %s131 = scalar_select %p128, %s129, %s130
    %p134 = pneg %p128
    %p135 = scmp.eq.s32.totalorder %s10, 3
    %p136 = por %p134, %p135
    %p137 = scmp.ne.s32.totalorder %s129, %s132
    %p138 = scmp.eq.s32.totalorder %s10, 0
    %p139 = por %p137, %p138
    %p140 = scmp.ne.s32.totalorder %s129, %s132
    %p141 = scmp.eq.s32.totalorder %s15, 3
    %p142 = por %p140, %p141
    %p143 = scmp.ne.s32.totalorder %s132, %s133
    %p144 = scmp.eq.s32.totalorder %s15, 0
    %p145 = por %p143, %p144
    %p146 = scmp.ne.s32.totalorder %s132, %s133
    %p147 = scmp.eq.s32.totalorder %s16, 3
    %p148 = por %p146, %p147
    %p150 = scmp.ne.s32.totalorder %s133, %s149
    %p151 = scmp.eq.s32.totalorder %s16, 0
    %p152 = por %p150, %p151
    %p153 = scmp.le.s32.totalorder 1, %s10
    %p154 = scmp.lt.s32.totalorder %s10, 5
    %p155 = pnand %p153, %p154
    %p156 = pneg %p155
    // Predicated region
    $region9: #{compression_model_forward.1} parent=5 // pred_check
      _
    $region10: #{compression_model_forward.1} parent=5 // pred_check_branch
      %158 = sbr.rel (%p155) target = $region12
    $region11: #{compression_model_forward.1} parent=5 // pred_region
      %s159 = ssub.s32 %s10, 1
      // Predicated region
      $region13: #{compression_model_forward.1} parent=11 // pred_check
        %p160 = pneg %p55
      $region14: #{compression_model_forward.1} parent=11 // pred_check_branch
        %162 = sbr.rel (%p160) target = $region16
      $region15: #{compression_model_forward.1} parent=11 // pred_region
        %p163 = scmp.lt.s32.totalorder %s21, 0
        %s164 = scalar_select %p163, %s21, 0
        %s165 = smul.addr %s164, 8
        %s166 = scalar_lea.vmem %s0, %s165
      $region16: #{compression_model_forward.1} parent=11 // pred_fallthru
        _
    $region12: #{compression_model_forward.1} parent=5 // pred_fallthru
      _
    %p167 = scmp.lt.s32.totalorder %s10, 4
    // Predicated region
    $region17: #{compression_model_forward.1} parent=5 // pred_check
      %p168 = pneg %p167
    $region18: #{compression_model_forward.1} parent=5 // pred_check_branch
      %170 = sbr.rel (%p168) target = $region20
    $region19: #{compression_model_forward.1} parent=5 // pred_region
      // Predicated region
      $region21: #{compression_model_forward.1} parent=19 // pred_check
        %p171 = pneg %p79
      $region22: #{compression_model_forward.1} parent=19 // pred_check_branch
        %173 = sbr.rel (%p171) target = $region24
      $region23: #{compression_model_forward.1} parent=19 // pred_region
        %p174 = scmp.lt.s32.totalorder %s17, 1
        %s175 = scalar_select %p174, %s17, 1
        %p176 = scmp.lt.s32.totalorder %s18, 0
        %s177 = scalar_select %p176, %s18, 0
        %p178 = scmp.lt.s32.totalorder %s19, 1
        %s179 = scalar_select %p178, %s19, 1
        %s180 = smul.addr %s177, 2
        %s181 = sadd.s32 %s179, %s180
        %s182 = smul.addr %s175, 2
        %s183 = sadd.s32 %s181, %s182
        %s184 = smul.addr %s183, 8
        %s185 = scalar_lea.vmem %s1, %s184
      $region24: #{compression_model_forward.1} parent=19 // pred_fallthru
        _
    $region20: #{compression_model_forward.1} parent=5 // pred_fallthru
      _
    %p186 = scmp.le.s32.totalorder 1, %s10
    %p187 = scmp.lt.s32.totalorder %s10, 5
    %p188 = pnand %p186, %p187
    %p189 = pneg %p188
    // Predicated region
    $region25: #{compression_model_forward.1} parent=5 // pred_check
      _
    $region26: #{compression_model_forward.1} parent=5 // pred_check_branch
      %191 = sbr.rel (%p188) target = $region28
    $region27: #{compression_model_forward.1} parent=5 // pred_region
      %s192 = ssub.s32 %s10, 1
      %p193 = scmp.lt.s32.totalorder %s21, 0
      %s194 = scalar_select %p193, %s21, 0
      %s195 = smul.addr %s194, 8
      %s196 = scalar_lea.vmem %s0, %s195
      %p197 = pneg %p55
      %p198 = pneg %p52
      %p199 = scmp.lt.s32.totalorder %s20, 1
      %s200 = scalar_select %p199, %s20, 1
      %p201 = scmp.lt.s32.totalorder %s21, 0
      %s202 = scalar_select %p201, %s21, 0
      %p203 = scmp.lt.s32.totalorder %s22, 1
      %s204 = scalar_select %p203, %s22, 1
      %s205 = smul.addr %s202, 2
      %s206 = sadd.s32 %s204, %s205
      %s207 = smul.addr %s200, 2
      %s208 = sadd.s32 %s206, %s207
      %s209 = smul.addr %s208, 8
      %s210 = scalar_lea.vmem %s1, %s209
      %p211 = pneg %p85
      %p212 = pneg %p82
      %p213 = pneg %p115
      %p214 = pneg %p112
      %p215 = scmp.lt.s32.totalorder %s20, 1
      %s216 = scalar_select %p215, %s20, 1
      %p217 = scmp.lt.s32.totalorder %s21, 0
      %s218 = scalar_select %p217, %s21, 0
      %p219 = scmp.lt.s32.totalorder %s22, 1
      %s220 = scalar_select %p219, %s22, 1
      %s221 = smul.addr %s218, 2
      %s222 = sadd.s32 %s220, %s221
      %s223 = smul.addr %s216, 2
      %s224 = sadd.s32 %s222, %s223
      %s225 = smul.addr %s224, 8
      %s226 = scalar_lea.vmem %s2, %s225
      %p227 = pneg %p145
      %p228 = pneg %p142
      %p229 = scmp.lt.s32.totalorder %s20, 1
      %s230 = scalar_select %p229, %s20, 1
      %p231 = scmp.lt.s32.totalorder %s21, 0
      %s232 = scalar_select %p231, %s21, 0
      %p233 = scmp.lt.s32.totalorder %s22, 1
      %s234 = scalar_select %p233, %s22, 1
      %s235 = smul.addr %s232, 2
      %s236 = sadd.s32 %s234, %s235
      %s237 = smul.addr %s230, 2
      %s238 = sadd.s32 %s236, %s237
      %s239 = smul.addr %s238, 8
      %s240 = scalar_lea.vmem %s3, %s239
      %p241 = scmp.lt.s32.totalorder %s21, 0
      %s242 = scalar_select %p241, %s21, 0
      %s243 = smul.addr %s242, 8
      %s244 = scalar_lea.vmem %s0, %s243
      %p245 = scmp.lt.s32.totalorder %s20, 1
      %s246 = scalar_select %p245, %s20, 1
      %p247 = scmp.lt.s32.totalorder %s21, 0
      %s248 = scalar_select %p247, %s21, 0
      %p249 = scmp.lt.s32.totalorder %s22, 1
      %s250 = scalar_select %p249, %s22, 1
      %s251 = smul.addr %s248, 2
      %s252 = sadd.s32 %s250, %s251
      %s253 = smul.addr %s246, 2
      %s254 = sadd.s32 %s252, %s253
      %s255 = smul.addr %s254, 8
      %s256 = scalar_lea.vmem %s1, %s255
      %p257 = scmp.lt.s32.totalorder %s20, 1
      %s258 = scalar_select %p257, %s20, 1
      %p259 = scmp.lt.s32.totalorder %s21, 0
      %s260 = scalar_select %p259, %s21, 0
      %p261 = scmp.lt.s32.totalorder %s22, 1
      %s262 = scalar_select %p261, %s22, 1
      %s263 = smul.addr %s260, 2
      %s264 = sadd.s32 %s262, %s263
      %s265 = smul.addr %s258, 2
      %s266 = sadd.s32 %s264, %s265
      %s267 = smul.addr %s266, 8
      %s268 = scalar_lea.vmem %s2, %s267
      %p269 = scmp.lt.s32.totalorder %s20, 1
      %s270 = scalar_select %p269, %s20, 1
      %p271 = scmp.lt.s32.totalorder %s21, 0
      %s272 = scalar_select %p271, %s21, 0
      %p273 = scmp.lt.s32.totalorder %s22, 1
      %s274 = scalar_select %p273, %s22, 1
      %s275 = smul.addr %s272, 2
      %s276 = sadd.s32 %s274, %s275
      %s277 = smul.addr %s270, 2
      %s278 = sadd.s32 %s276, %s277
      %s279 = smul.addr %s278, 8
      %s280 = scalar_lea.vmem %s3, %s279
      %v281 = vld [vmem:[%s244] sm:$0xff]
      %v282 = vld [vmem:[%s256] sm:$0xff]
      %284 = vset.pattern.permute.xlu0 0
      %285 = vperm.xlu0 %284, %v281
      %v286 = vpop.permute.xlu0 %285
      %v288 = vsub.f32 %v282, %v286
      %v289 = vround.ne.pseudo %v288
      %v290 = vadd.f32 %v289, %v286
      %291 = vst [vmem:[%s268] sm:$0xff] %v290
      %v292 = vsub.f32 %v290, 0.5
      %293 = vset.pattern.permute.xlu0 1
      %294 = vperm.xlu0 %293, %v281
      %v295 = vpop.permute.xlu0 %294
      %v297 = vmul.f32 %v295, %v292
      %298 = vset.pattern.permute.xlu0 34
      %299 = vperm.xlu0 %298, %v281
      %v300 = vpop.permute.xlu0 %299
      %v302 = vadd.f32 %v300, %v297
      %v303 = vadd.f32 %v302, %v295
      %v304 = vtanh.pop %v302
      %305 = vset.pattern.permute.xlu0 47
      %306 = vperm.xlu0 %305, %v281
      %v307 = vpop.permute.xlu0 %306
      %v309 = vmul.f32 %v307, %v304
      %v310 = vadd.f32 %v302, %v309
      %v311 = vtanh.pop %v303
      %v312 = vmul.f32 %v307, %v311
      %v313 = vadd.f32 %v303, %v312
      %314 = vset.pattern.permute.xlu0 2
      %315 = vperm.xlu0 %314, %v281
      %v316 = vpop.permute.xlu0 %315
      %v318 = vmul.f32 %v316, %v292
      %319 = vset.pattern.permute.xlu0 35
      %320 = vperm.xlu0 %319, %v281
      %v321 = vpop.permute.xlu0 %320
      %v323 = vadd.f32 %v321, %v318
      %v324 = vadd.f32 %v323, %v316
      %v325 = vtanh.pop %v323
      %326 = vset.pattern.permute.xlu0 48
      %327 = vperm.xlu0 %326, %v281
      %v328 = vpop.permute.xlu0 %327
      %v330 = vmul.f32 %v328, %v325
      %v331 = vadd.f32 %v323, %v330
      %v332 = vtanh.pop %v324
      %v333 = vmul.f32 %v328, %v332
      %v334 = vadd.f32 %v324, %v333
      %335 = vset.pattern.permute.xlu0 3
      %336 = vperm.xlu0 %335, %v281
      %v337 = vpop.permute.xlu0 %336
      %v339 = vmul.f32 %v337, %v292
      %340 = vset.pattern.permute.xlu0 36
      %341 = vperm.xlu0 %340, %v281
      %v342 = vpop.permute.xlu0 %341
      %v344 = vadd.f32 %v342, %v339
      %v345 = vadd.f32 %v344, %v337
      %v346 = vtanh.pop %v344
      %347 = vset.pattern.permute.xlu0 49
      %348 = vperm.xlu0 %347, %v281
      %v349 = vpop.permute.xlu0 %348
      %v351 = vmul.f32 %v349, %v346
      %v352 = vadd.f32 %v344, %v351
      %v353 = vtanh.pop %v345
      %v354 = vmul.f32 %v349, %v353
      %v355 = vadd.f32 %v345, %v354
      %356 = vset.pattern.permute.xlu0 4
      %357 = vperm.xlu0 %356, %v281
      %v358 = vpop.permute.xlu0 %357
      %v360 = vmul.f32 %v358, %v310
      %361 = vset.pattern.permute.xlu0 37
      %362 = vperm.xlu0 %361, %v281
      %v363 = vpop.permute.xlu0 %362
      %v365 = vadd.f32 %v363, %v360
      %v366 = vmul.f32 %v358, %v313
      %v367 = vadd.f32 %v363, %v366
      %368 = vset.pattern.permute.xlu0 5
      %369 = vperm.xlu0 %368, %v281
      %v370 = vpop.permute.xlu0 %369
      %v372 = vmul.f32 %v370, %v331
      %v373 = vadd.f32 %v365, %v372
      %v374 = vmul.f32 %v370, %v334
      %v375 = vadd.f32 %v367, %v374
      %376 = vset.pattern.permute.xlu0 6
      %377 = vperm.xlu0 %376, %v281
      %v378 = vpop.permute.xlu0 %377
      %v380 = vmul.f32 %v378, %v352
      %v381 = vadd.f32 %v373, %v380
      %v382 = vmul.f32 %v378, %v355
      %v383 = vadd.f32 %v375, %v382
      %v384 = vtanh.pop %v381
      %385 = vset.pattern.permute.xlu0 50
      %386 = vperm.xlu0 %385, %v281
      %v387 = vpop.permute.xlu0 %386
      %v389 = vmul.f32 %v387, %v384
      %v390 = vadd.f32 %v381, %v389
      %v391 = vtanh.pop %v383
      %v392 = vmul.f32 %v387, %v391
      %v393 = vadd.f32 %v383, %v392
      %394 = vset.pattern.permute.xlu0 7
      %395 = vperm.xlu0 %394, %v281
      %v396 = vpop.permute.xlu0 %395
      %v398 = vmul.f32 %v396, %v310
      %399 = vset.pattern.permute.xlu0 38
      %400 = vperm.xlu0 %399, %v281
      %v401 = vpop.permute.xlu0 %400
      %v403 = vadd.f32 %v401, %v398
      %v404 = vmul.f32 %v396, %v313
      %v405 = vadd.f32 %v401, %v404
      %406 = vset.pattern.permute.xlu0 8
      %407 = vperm.xlu0 %406, %v281
      %v408 = vpop.permute.xlu0 %407
      %v410 = vmul.f32 %v408, %v331
      %v411 = vadd.f32 %v403, %v410
      %v412 = vmul.f32 %v408, %v334
      %v413 = vadd.f32 %v405, %v412
      %414 = vset.pattern.permute.xlu0 9
      %415 = vperm.xlu0 %414, %v281
      %v416 = vpop.permute.xlu0 %415
      %v418 = vmul.f32 %v416, %v352
      %v419 = vadd.f32 %v411, %v418
      %v420 = vmul.f32 %v416, %v355
      %v421 = vadd.f32 %v413, %v420
      %v422 = vtanh.pop %v419
      %423 = vset.pattern.permute.xlu0 51
      %424 = vperm.xlu0 %423, %v281
      %v425 = vpop.permute.xlu0 %424
      %v427 = vmul.f32 %v425, %v422
      %v428 = vadd.f32 %v419, %v427
      %v429 = vtanh.pop %v421
      %v430 = vmul.f32 %v425, %v429
      %v431 = vadd.f32 %v421, %v430
      %432 = vset.pattern.permute.xlu0 10
      %433 = vperm.xlu0 %432, %v281
      %v434 = vpop.permute.xlu0 %433
      %v436 = vmul.f32 %v434, %v310
      %437 = vset.pattern.permute.xlu0 39
      %438 = vperm.xlu0 %437, %v281
      %v439 = vpop.permute.xlu0 %438
      %v441 = vadd.f32 %v439, %v436
      %v442 = vmul.f32 %v434, %v313
      %v443 = vadd.f32 %v439, %v442
      %444 = vset.pattern.permute.xlu0 11
      %445 = vperm.xlu0 %444, %v281
      %v446 = vpop.permute.xlu0 %445
      %v448 = vmul.f32 %v446, %v331
      %v449 = vadd.f32 %v441, %v448
      %v450 = vmul.f32 %v446, %v334
      %v451 = vadd.f32 %v443, %v450
      %452 = vset.pattern.permute.xlu0 12
      %453 = vperm.xlu0 %452, %v281
      %v454 = vpop.permute.xlu0 %453
      %v456 = vmul.f32 %v454, %v352
      %v457 = vadd.f32 %v449, %v456
      %v458 = vmul.f32 %v454, %v355
      %v459 = vadd.f32 %v451, %v458
      %v460 = vtanh.pop %v457
      %461 = vset.pattern.permute.xlu0 52
      %462 = vperm.xlu0 %461, %v281
      %v463 = vpop.permute.xlu0 %462
      %v465 = vmul.f32 %v463, %v460
      %v466 = vadd.f32 %v457, %v465
      %v467 = vtanh.pop %v459
      %v468 = vmul.f32 %v463, %v467
      %v469 = vadd.f32 %v459, %v468
      %470 = vset.pattern.permute.xlu0 13
      %471 = vperm.xlu0 %470, %v281
      %v472 = vpop.permute.xlu0 %471
      %v474 = vmul.f32 %v472, %v390
      %475 = vset.pattern.permute.xlu0 40
      %476 = vperm.xlu0 %475, %v281
      %v477 = vpop.permute.xlu0 %476
      %v479 = vadd.f32 %v477, %v474
      %v480 = vmul.f32 %v472, %v393
      %v481 = vadd.f32 %v477, %v480
      %482 = vset.pattern.permute.xlu0 14
      %483 = vperm.xlu0 %482, %v281
      %v484 = vpop.permute.xlu0 %483
      %v486 = vmul.f32 %v484, %v428
      %v487 = vadd.f32 %v479, %v486
      %v488 = vmul.f32 %v484, %v431
      %v489 = vadd.f32 %v481, %v488
      %490 = vset.pattern.permute.xlu0 15
      %491 = vperm.xlu0 %490, %v281
      %v492 = vpop.permute.xlu0 %491
      %v494 = vmul.f32 %v492, %v466
      %v495 = vadd.f32 %v487, %v494
      %v496 = vmul.f32 %v492, %v469
      %v497 = vadd.f32 %v489, %v496
      %v498 = vtanh.pop %v495
      %499 = vset.pattern.permute.xlu0 53
      %500 = vperm.xlu0 %499, %v281
      %v501 = vpop.permute.xlu0 %500
      %v503 = vmul.f32 %v501, %v498
      %v504 = vadd.f32 %v495, %v503
      %v505 = vtanh.pop %v497
      %v506 = vmul.f32 %v501, %v505
      %v507 = vadd.f32 %v497, %v506
      %508 = vset.pattern.permute.xlu0 16
      %509 = vperm.xlu0 %508, %v281
      %v510 = vpop.permute.xlu0 %509
      %v512 = vmul.f32 %v510, %v390
      %513 = vset.pattern.permute.xlu0 41
      %514 = vperm.xlu0 %513, %v281
      %v515 = vpop.permute.xlu0 %514
      %v517 = vadd.f32 %v515, %v512
      %v518 = vmul.f32 %v510, %v393
      %v519 = vadd.f32 %v515, %v518
      %520 = vset.pattern.permute.xlu0 17
      %521 = vperm.xlu0 %520, %v281
      %v522 = vpop.permute.xlu0 %521
      %v524 = vmul.f32 %v522, %v428
      %v525 = vadd.f32 %v517, %v524
      %v526 = vmul.f32 %v522, %v431
      %v527 = vadd.f32 %v519, %v526
      %528 = vset.pattern.permute.xlu0 18
      %529 = vperm.xlu0 %528, %v281
      %v530 = vpop.permute.xlu0 %529
      %v532 = vmul.f32 %v530, %v466
      %v533 = vadd.f32 %v525, %v532
      %v534 = vmul.f32 %v530, %v469
      %v535 = vadd.f32 %v527, %v534
      %v536 = vtanh.pop %v533
      %537 = vset.pattern.permute.xlu0 54
      %538 = vperm.xlu0 %537, %v281
      %v539 = vpop.permute.xlu0 %538
      %v541 = vmul.f32 %v539, %v536
      %v542 = vadd.f32 %v533, %v541
      %v543 = vtanh.pop %v535
      %v544 = vmul.f32 %v539, %v543
      %v545 = vadd.f32 %v535, %v544
      %546 = vset.pattern.permute.xlu0 19
      %547 = vperm.xlu0 %546, %v281
      %v548 = vpop.permute.xlu0 %547
      %v550 = vmul.f32 %v548, %v390
      %551 = vset.pattern.permute.xlu0 42
      %552 = vperm.xlu0 %551, %v281
      %v553 = vpop.permute.xlu0 %552
      %v555 = vadd.f32 %v553, %v550
      %v556 = vmul.f32 %v548, %v393
      %v557 = vadd.f32 %v553, %v556
      %558 = vset.pattern.permute.xlu0 20
      %559 = vperm.xlu0 %558, %v281
      %v560 = vpop.permute.xlu0 %559
      %v562 = vmul.f32 %v560, %v428
      %v563 = vadd.f32 %v555, %v562
      %v564 = vmul.f32 %v560, %v431
      %v565 = vadd.f32 %v557, %v564
      %566 = vset.pattern.permute.xlu0 21
      %567 = vperm.xlu0 %566, %v281
      %v568 = vpop.permute.xlu0 %567
      %v570 = vmul.f32 %v568, %v466
      %v571 = vadd.f32 %v563, %v570
      %v572 = vmul.f32 %v568, %v469
      %v573 = vadd.f32 %v565, %v572
      %v574 = vtanh.pop %v571
      %575 = vset.pattern.permute.xlu0 55
      %576 = vperm.xlu0 %575, %v281
      %v577 = vpop.permute.xlu0 %576
      %v579 = vmul.f32 %v577, %v574
      %v580 = vadd.f32 %v571, %v579
      %v581 = vtanh.pop %v573
      %v582 = vmul.f32 %v577, %v581
      %v583 = vadd.f32 %v573, %v582
      %584 = vset.pattern.permute.xlu0 22
      %585 = vperm.xlu0 %584, %v281
      %v586 = vpop.permute.xlu0 %585
      %v588 = vmul.f32 %v586, %v504
      %589 = vset.pattern.permute.xlu0 43
      %590 = vperm.xlu0 %589, %v281
      %v591 = vpop.permute.xlu0 %590
      %v593 = vadd.f32 %v591, %v588
      %v594 = vmul.f32 %v586, %v507
      %v595 = vadd.f32 %v591, %v594
      %596 = vset.pattern.permute.xlu0 23
      %597 = vperm.xlu0 %596, %v281
      %v598 = vpop.permute.xlu0 %597
      %v600 = vmul.f32 %v598, %v542
      %v601 = vadd.f32 %v593, %v600
      %v602 = vmul.f32 %v598, %v545
      %v603 = vadd.f32 %v595, %v602
      %604 = vset.pattern.permute.xlu0 24
      %605 = vperm.xlu0 %604, %v281
      %v606 = vpop.permute.xlu0 %605
      %v608 = vmul.f32 %v606, %v580
      %v609 = vadd.f32 %v601, %v608
      %v610 = vmul.f32 %v606, %v583
      %v611 = vadd.f32 %v603, %v610
      %v612 = vtanh.pop %v609
      %613 = vset.pattern.permute.xlu0 56
      %614 = vperm.xlu0 %613, %v281
      %v615 = vpop.permute.xlu0 %614
      %v617 = vmul.f32 %v615, %v612
      %v618 = vadd.f32 %v609, %v617
      %v619 = vtanh.pop %v611
      %v620 = vmul.f32 %v615, %v619
      %v621 = vadd.f32 %v611, %v620
      %622 = vset.pattern.permute.xlu0 25
      %623 = vperm.xlu0 %622, %v281
      %v624 = vpop.permute.xlu0 %623
      %v626 = vmul.f32 %v624, %v504
      %627 = vset.pattern.permute.xlu0 44
      %628 = vperm.xlu0 %627, %v281
      %v629 = vpop.permute.xlu0 %628
      %v631 = vadd.f32 %v629, %v626
      %v632 = vmul.f32 %v624, %v507
      %v633 = vadd.f32 %v629, %v632
      %634 = vset.pattern.permute.xlu0 26
      %635 = vperm.xlu0 %634, %v281
      %v636 = vpop.permute.xlu0 %635
      %v638 = vmul.f32 %v636, %v542
      %v639 = vadd.f32 %v631, %v638
      %v640 = vmul.f32 %v636, %v545
      %v641 = vadd.f32 %v633, %v640
      %642 = vset.pattern.permute.xlu0 27
      %643 = vperm.xlu0 %642, %v281
      %v644 = vpop.permute.xlu0 %643
      %v646 = vmul.f32 %v644, %v580
      %v647 = vadd.f32 %v639, %v646
      %v648 = vmul.f32 %v644, %v583
      %v649 = vadd.f32 %v641, %v648
      %v650 = vtanh.pop %v647
      %651 = vset.pattern.permute.xlu0 57
      %652 = vperm.xlu0 %651, %v281
      %v653 = vpop.permute.xlu0 %652
      %v655 = vmul.f32 %v653, %v650
      %v656 = vadd.f32 %v647, %v655
      %v657 = vtanh.pop %v649
      %v658 = vmul.f32 %v653, %v657
      %v659 = vadd.f32 %v649, %v658
      %660 = vset.pattern.permute.xlu0 28
      %661 = vperm.xlu0 %660, %v281
      %v662 = vpop.permute.xlu0 %661
      %v664 = vmul.f32 %v662, %v504
      %665 = vset.pattern.permute.xlu0 45
      %666 = vperm.xlu0 %665, %v281
      %v667 = vpop.permute.xlu0 %666
      %v669 = vadd.f32 %v667, %v664
      %v670 = vmul.f32 %v662, %v507
      %v671 = vadd.f32 %v667, %v670
      %672 = vset.pattern.permute.xlu0 29
      %673 = vperm.xlu0 %672, %v281
      %v674 = vpop.permute.xlu0 %673
      %v676 = vmul.f32 %v674, %v542
      %v677 = vadd.f32 %v669, %v676
      %v678 = vmul.f32 %v674, %v545
      %v679 = vadd.f32 %v671, %v678
      %680 = vset.pattern.permute.xlu0 30
      %681 = vperm.xlu0 %680, %v281
      %v682 = vpop.permute.xlu0 %681
      %v684 = vmul.f32 %v682, %v580
      %v685 = vadd.f32 %v677, %v684
      %v686 = vmul.f32 %v682, %v583
      %v687 = vadd.f32 %v679, %v686
      %v688 = vtanh.pop %v685
      %689 = vset.pattern.permute.xlu0 58
      %690 = vperm.xlu0 %689, %v281
      %v691 = vpop.permute.xlu0 %690
      %v693 = vmul.f32 %v691, %v688
      %v694 = vadd.f32 %v685, %v693
      %v695 = vtanh.pop %v687
      %v696 = vmul.f32 %v691, %v695
      %v697 = vadd.f32 %v687, %v696
      %698 = vset.pattern.permute.xlu0 31
      %699 = vperm.xlu0 %698, %v281
      %v700 = vpop.permute.xlu0 %699
      %v702 = vmul.f32 %v700, %v618
      %703 = vset.pattern.permute.xlu0 46
      %704 = vperm.xlu0 %703, %v281
      %v705 = vpop.permute.xlu0 %704
      %v707 = vadd.f32 %v705, %v702
      %v708 = vmul.f32 %v700, %v621
      %v709 = vadd.f32 %v705, %v708
      %710 = vset.pattern.permute.xlu0 32
      %711 = vperm.xlu0 %710, %v281
      %v712 = vpop.permute.xlu0 %711
      %v714 = vmul.f32 %v712, %v656
      %v715 = vadd.f32 %v707, %v714
      %v716 = vmul.f32 %v712, %v659
      %v717 = vadd.f32 %v709, %v716
      %718 = vset.pattern.permute.xlu0 33
      %719 = vperm.xlu0 %718, %v281
      %v720 = vpop.permute.xlu0 %719
      %v722 = vmul.f32 %v720, %v694
      %v723 = vadd.f32 %v715, %v722
      %v724 = vmul.f32 %v720, %v697
      %v725 = vadd.f32 %v717, %v724
      %v726 = vadd.f32 %v723, %v725
      %vm727 = vcmp.gt.f32.partialorder %v726, 0.0
      %vm728 = vcmp.lt.f32.partialorder %v726, 0.0
      %v729 = vsel %vm728, 1.0, 0.0
      %v730 = vsel %vm727, -1.0, %v729
      %v731 = vmul.f32 %v730, %v725
      %v732 = vxor.u32 %v731, 2147483648
      %v733 = vmul.f32 %v732, 1.442695
      %v734 = vpow.pop %v733
      %v735 = vadd.f32 %v734, 1.0
      %v736 = vrcp.pop %v735
      %v737 = vmul.f32 1.0, %v736
      %v738 = vmul.f32 %v730, %v723
      %v739 = vxor.u32 %v738, 2147483648
      %v740 = vmul.f32 %v739, 1.442695
      %v741 = vpow.pop %v740
      %v742 = vadd.f32 %v741, 1.0
      %v743 = vrcp.pop %v742
      %v744 = vmul.f32 1.0, %v743
      %v745 = vsub.f32 %v737, %v744
      %v746 = vand.u32 2147483647, %v745
      %v747 = vmax.f32 %v746, 1e-09
      %748 = vst [vmem:[%s280] sm:$0xff] %v747
      %p749 = scmp.lt.s32.totalorder %s20, 1
      %s750 = scalar_select %p749, %s20, 1
      %p751 = scmp.lt.s32.totalorder %s21, 0
      %s752 = scalar_select %p751, %s21, 0
      %p753 = scmp.lt.s32.totalorder %s22, 1
      %s754 = scalar_select %p753, %s22, 1
      %s755 = smul.addr %s752, 2
      %s756 = sadd.s32 %s754, %s755
      %s757 = smul.addr %s750, 2
      %s758 = sadd.s32 %s756, %s757
      %s759 = smul.addr %s758, 8
      %s760 = scalar_lea.vmem %s2, %s759
      %p761 = scmp.lt.s32.totalorder %s20, 1
      %s762 = scalar_select %p761, %s20, 1
      %p763 = scmp.lt.s32.totalorder %s21, 0
      %s764 = scalar_select %p763, %s21, 0
      %p765 = scmp.lt.s32.totalorder %s22, 1
      %s766 = scalar_select %p765, %s22, 1
      %s767 = smul.addr %s764, 2
      %s768 = sadd.s32 %s766, %s767
      %s769 = smul.addr %s762, 2
      %s770 = sadd.s32 %s768, %s769
      %s771 = smul.addr %s770, 8
      %s772 = scalar_lea.vmem %s3, %s771
      // Predicated region
      $region29: #{compression_model_forward.1} parent=27 // pred_check
        %p773 = pneg %p112
      $region30: #{compression_model_forward.1} parent=27 // pred_check_branch
        %775 = sbr.rel (%p773) target = $region32
      $region31: #{compression_model_forward.1} parent=27 // pred_region
        _
      $region32: #{compression_model_forward.1} parent=27 // pred_fallthru
        _
      // Predicated region
      $region33: #{compression_model_forward.1} parent=27 // pred_check
        %p776 = pneg %p142
      $region34: #{compression_model_forward.1} parent=27 // pred_check_branch
        %778 = sbr.rel (%p776) target = $region36
      $region35: #{compression_model_forward.1} parent=27 // pred_region
        _
      $region36: #{compression_model_forward.1} parent=27 // pred_fallthru
        _
    $region28: #{compression_model_forward.1} parent=5 // pred_fallthru
      _
    %p779 = scmp.le.s32.totalorder 2, %s10
    // Predicated region
    $region37: #{compression_model_forward.1} parent=5 // pred_check
      %p780 = pneg %p779
    $region38: #{compression_model_forward.1} parent=5 // pred_check_branch
      %782 = sbr.rel (%p780) target = $region40
    $region39: #{compression_model_forward.1} parent=5 // pred_region
      %s783 = ssub.s32 %s10, 2
      // Predicated region
      $region41: #{compression_model_forward.1} parent=39 // pred_check
        %p784 = pneg %p118
      $region42: #{compression_model_forward.1} parent=39 // pred_check_branch
        %786 = sbr.rel (%p784) target = $region44
      $region43: #{compression_model_forward.1} parent=39 // pred_region
        %p787 = scmp.lt.s32.totalorder %s23, 1
        %s788 = scalar_select %p787, %s23, 1
        %p789 = scmp.lt.s32.totalorder %s24, 0
        %s790 = scalar_select %p789, %s24, 0
        %p791 = scmp.lt.s32.totalorder %s25, 1
        %s792 = scalar_select %p791, %s25, 1
        %s793 = smul.addr %s790, 2
        %s794 = sadd.s32 %s792, %s793
        %s795 = smul.addr %s788, 2
        %s796 = sadd.s32 %s794, %s795
        %s797 = smul.addr %s796, 8
        %s798 = scalar_lea.vmem %s2, %s797
      $region44: #{compression_model_forward.1} parent=39 // pred_fallthru
        _
      // Predicated region
      $region45: #{compression_model_forward.1} parent=39 // pred_check
        %p799 = pneg %p148
      $region46: #{compression_model_forward.1} parent=39 // pred_check_branch
        %801 = sbr.rel (%p799) target = $region48
      $region47: #{compression_model_forward.1} parent=39 // pred_region
        %p802 = scmp.lt.s32.totalorder %s23, 1
        %s803 = scalar_select %p802, %s23, 1
        %p804 = scmp.lt.s32.totalorder %s24, 0
        %s805 = scalar_select %p804, %s24, 0
        %p806 = scmp.lt.s32.totalorder %s25, 1
        %s807 = scalar_select %p806, %s25, 1
        %s808 = smul.addr %s805, 2
        %s809 = sadd.s32 %s807, %s808
        %s810 = smul.addr %s803, 2
        %s811 = sadd.s32 %s809, %s810
        %s812 = smul.addr %s811, 8
        %s813 = scalar_lea.vmem %s3, %s812
      $region48: #{compression_model_forward.1} parent=39 // pred_fallthru
        _
    $region40: #{compression_model_forward.1} parent=5 // pred_fallthru
      _
  $region6: #{compression_model_forward.1} parent=0 // loop_footer
    %s14 = sadd.s32 1, %s10
  $region7: #{compression_model_forward.1} parent=0 // loop_footer_branch
    %9 = sbr.rel target = $region3
  $region8: #{compression_model_forward.1} parent=0 // loop_exit
    _

</llo_original>
